<compile_context>
chip_gen: v6e
topology: v6e:2x2x1
jax: 0.10.0
libtpu: 0.0.40
codegen_flags: <defaults>
</compile_context>

<pallas_src>
import functools
import math

import jax
import jax.numpy as jnp
from jax.experimental import pallas as pl
from jax.experimental.pallas import tpu as pltpu


def _label_smoothing_kernel(x_ref, t_ref, err_ref, ok_ref, valid_ref, *,
                            padding_idx, confidence, smooth_val, ent_const):
    x = x_ref[...].astype(jnp.float32)      # (tm, V) log-probs (f32 compute)
    t = t_ref[...]                          # (tm, 1) int32 targets
    tm, V = x.shape

    cols = jax.lax.broadcasted_iota(jnp.int32, (tm, V), 1)
    valid = t != padding_idx                # (tm, 1) bool

    # KLDivLoss(reduction='sum') per row = sum td*log(td) - sum td*x.
    #   sum td*log(td) = confidence*log(confidence)
    #                    + (V-2)*smooth_val*log(smooth_val)   (trace-time const)
    #   sum td*x       = (confidence - smooth_val)*x[target]
    #                    + smooth_val*(rowsum(x) - x[:, padding_idx])
    x_t = jnp.sum(jnp.where(cols == t, x, 0.0), axis=1, keepdims=True)
    x_pad = jnp.sum(jnp.where(cols == padding_idx, x, 0.0), axis=1, keepdims=True)
    rowsum = jnp.sum(x, axis=1, keepdims=True)
    cross = (confidence - smooth_val) * x_t + smooth_val * (rowsum - x_pad)
    err_ref[...] = jnp.where(valid, ent_const - cross, 0.0)

    # argmax over vocab (first index achieving the row max), f32 comparisons.
    row_max = jnp.max(x, axis=1, keepdims=True)
    first_max = jnp.min(jnp.where(x >= row_max, cols, V), axis=1, keepdims=True)
    ok = jnp.logical_and(first_max == t, valid)
    ok_ref[...] = ok.astype(jnp.int32)
    valid_ref[...] = valid.astype(jnp.int32)


def label_smoothing_loss(x, target, *, size, padding_idx, smoothing, tm=None):
    """x: (N, V) float log-probs; target: (N,) int. Returns (err, nok, npred)."""
    N, V = x.shape
    assert V == size

    # Trace-time constants for the smoothed distribution.
    confidence = 1.0 - smoothing
    smooth_val = smoothing / (size - 2) if size > 2 else 0.0
    ent_const = 0.0
    if confidence > 0.0:
        ent_const += confidence * math.log(confidence)
    if smooth_val > 0.0:
        ent_const += (size - 2) * smooth_val * math.log(smooth_val)

    # --- Tile-size selection against VMEM (per-generation safe). -------------
    try:
        vmem_cap = int(pltpu.get_tpu_info().vmem_capacity_bytes)
    except Exception:  # pragma: no cover - conservative fallback (v7x size)
        vmem_cap = 64 << 20
    bpe = jnp.dtype(x.dtype).itemsize
    # Double-buffered (tm, V) input + 8 small (tm, 1) buffers (target + 3 outs),
    # each padded to a (8,128) tile internally (~512 B per row per buffer).
    per_row = 2 * V * bpe + 8 * 512
    budget = min(vmem_cap // 2, 24 << 20)
    if tm is None:
        tm = max(8, min((budget // per_row) // 8 * 8, 1024))
    tm = max(8, min(tm, ((N + 7) // 8) * 8))   # don't over-pad tiny batches

    # Pad rows so tm divides N; padded rows get target == padding_idx so they
    # are masked out of err / nok / npred.
    n_pad = ((N + tm - 1) // tm) * tm
    if n_pad > N:
        x = jnp.pad(x, ((0, n_pad - N), (0, 0)))
        target = jnp.pad(target, (0, n_pad - N), constant_values=padding_idx)
    t2d = target.astype(jnp.int32).reshape(n_pad, 1)

    vmem_limit = int(min(48 << 20, vmem_cap - (8 << 20)))

    kernel = functools.partial(
        _label_smoothing_kernel,
        padding_idx=padding_idx, confidence=confidence,
        smooth_val=smooth_val, ent_const=ent_const)

    err_rows, ok_rows, valid_rows = pl.pallas_call(
        kernel,
        out_shape=(
            jax.ShapeDtypeStruct((n_pad, 1), jnp.float32),
            jax.ShapeDtypeStruct((n_pad, 1), jnp.int32),
            jax.ShapeDtypeStruct((n_pad, 1), jnp.int32),
        ),
        grid_spec=pltpu.PrefetchScalarGridSpec(
            num_scalar_prefetch=0,
            grid=(n_pad // tm,),
            in_specs=[
                pl.BlockSpec((tm, V), lambda i: (i, 0)),
                pl.BlockSpec((tm, 1), lambda i: (i, 0)),
            ],
            out_specs=[
                pl.BlockSpec((tm, 1), lambda i: (i, 0)),
                pl.BlockSpec((tm, 1), lambda i: (i, 0)),
                pl.BlockSpec((tm, 1), lambda i: (i, 0)),
            ],
        ),
        compiler_params=pltpu.CompilerParams(
            dimension_semantics=("parallel",),
            vmem_limit_bytes=vmem_limit),
    )(x, t2d)

    # Tiny outer reductions (output traffic is ~V x smaller than input).
    err = jnp.sum(err_rows)
    nok = jnp.sum(ok_rows)
    npred = jnp.sum(valid_rows)
    return err, nok, npred


def _reference(x, target, *, size, padding_idx, smoothing):
    confidence = 1.0 - smoothing
    smooth_val = smoothing / (size - 2)
    N, V = x.shape
    true_dist = jnp.full((N, V), smooth_val, jnp.float32)
    true_dist = true_dist.at[jnp.arange(N), target].set(confidence)
    true_dist = true_dist.at[:, padding_idx].set(0.0)
    true_dist = jnp.where((target == padding_idx)[:, None], 0.0, true_dist)
    kl = jnp.where(true_dist > 0,
                   true_dist * (jnp.log(jnp.where(true_dist > 0, true_dist, 1.0)) - x),
                   0.0)
    err = jnp.sum(kl)
    npred = jnp.sum(target != padding_idx)
    ypred = jnp.argmax(x, axis=1)
    nok = jnp.sum((ypred == target) & (target != padding_idx))
    return err, nok, npred


if __name__ == "__main__":
    # Module hyperparameters (deterministic, set in-script).
    size = 128          # vocab size (x.shape[1])
    padding_idx = 0
    smoothing = 0.1

    N = 16              # flattened batch*seq (small demo shape)
    key = jax.random.PRNGKey(0)
    kx, kt, kp = jax.random.split(key, 3)

    logits = jax.random.normal(kx, (N, size), jnp.float32)
    x = jax.nn.log_softmax(logits, axis=-1)          # KLDivLoss expects log-probs
    target = jax.random.randint(kt, (N,), 1, size, jnp.int32)
    # Force a few padding targets to exercise the masking path.
    pad_rows = jax.random.bernoulli(kp, 0.25, (N,))
    target = jnp.where(pad_rows, padding_idx, target)

    err, nok, npred = label_smoothing_loss(
        x, target, size=size, padding_idx=padding_idx, smoothing=smoothing)
    jax.block_until_ready((err, nok, npred))

    r_err, r_nok, r_npred = _reference(
        x, target, size=size, padding_idx=padding_idx, smoothing=smoothing)
    assert jnp.allclose(err, r_err, rtol=1e-4, atol=1e-4), (err, r_err)
    assert int(nok) == int(r_nok), (nok, r_nok)
    assert int(npred) == int(r_npred), (npred, r_npred)

    print("KERNEL_OK")
</pallas_src>

<mosaic_0001>
module attributes {stable_mosaic.version = 11 : i64} {
  func.func @_label_smoothing_kernel(%arg0: i32, %arg1: memref<16x128xf32, #tpu.memory_space<vmem>>, %arg2: memref<16x1xi32, #tpu.memory_space<vmem>>, %arg3: memref<16x1xf32, #tpu.memory_space<vmem>>, %arg4: memref<16x1xi32, #tpu.memory_space<vmem>>, %arg5: memref<16x1xi32, #tpu.memory_space<vmem>>) attributes {dimension_semantics = [#tpu.dimension_semantics<parallel>], iteration_bounds = array<i64: 1>, scalar_prefetch = 0 : i64, scratch_operands = 0 : i64, tpu.core_type = #tpu.core_type<tc>, window_params = [{transform_indices = @transform_0, window_bounds = array<i64: 16, 128>}, {transform_indices = @transform_1, window_bounds = array<i64: 16, 1>}, {transform_indices = @transform_2, window_bounds = array<i64: 16, 1>}, {transform_indices = @transform_3, window_bounds = array<i64: 16, 1>}, {transform_indices = @transform_4, window_bounds = array<i64: 16, 1>}]} {
    %c0 = arith.constant 0 : index
    %c0_0 = arith.constant 0 : index
    %0 = vector.load %arg1[%c0, %c0_0] : memref<16x128xf32, #tpu.memory_space<vmem>>, vector<16x128xf32>
    %c0_1 = arith.constant 0 : index
    %c0_2 = arith.constant 0 : index
    %1 = vector.load %arg2[%c0_1, %c0_2] : memref<16x1xi32, #tpu.memory_space<vmem>>, vector<16x1xi32>
    %2 = tpu.iota {dimensions = array<i32: 1>} : vector<16x128xi32>
    %c0_i32 = arith.constant 0 : i32
    %3 = vector.broadcast %c0_i32 : i32 to vector<16x1xi32>
    %4 = arith.cmpi ne, %1, %3 : vector<16x1xi32>
    %5 = vector.broadcast %1 : vector<16x1xi32> to vector<16x128xi32>
    %6 = arith.cmpi eq, %2, %5 : vector<16x128xi32>
    %cst = arith.constant 0.000000e+00 : f32
    %7 = vector.broadcast %cst : f32 to vector<16x128xf32>
    %8 = arith.select %6, %0, %7 : vector<16x128xi1>, vector<16x128xf32>
    %cst_3 = arith.constant dense<0.000000e+00> : vector<16xf32>
    %9 = vector.multi_reduction <add>, %8, %cst_3 [1] : vector<16x128xf32> to vector<16xf32>
    %10 = vector.shape_cast %9 : vector<16xf32> to vector<16x1xf32>
    %c0_i32_4 = arith.constant 0 : i32
    %11 = vector.broadcast %c0_i32_4 : i32 to vector<16x128xi32>
    %12 = arith.cmpi eq, %2, %11 : vector<16x128xi32>
    %cst_5 = arith.constant 0.000000e+00 : f32
    %13 = vector.broadcast %cst_5 : f32 to vector<16x128xf32>
    %14 = arith.select %12, %0, %13 : vector<16x128xi1>, vector<16x128xf32>
    %cst_6 = arith.constant dense<0.000000e+00> : vector<16xf32>
    %15 = vector.multi_reduction <add>, %14, %cst_6 [1] : vector<16x128xf32> to vector<16xf32>
    %16 = vector.shape_cast %15 : vector<16xf32> to vector<16x1xf32>
    %cst_7 = arith.constant dense<0.000000e+00> : vector<16xf32>
    %17 = vector.multi_reduction <add>, %0, %cst_7 [1] : vector<16x128xf32> to vector<16xf32>
    %18 = vector.shape_cast %17 : vector<16xf32> to vector<16x1xf32>
    %cst_8 = arith.constant 0.89920634 : f32
    %19 = vector.broadcast %cst_8 : f32 to vector<16x1xf32>
    %20 = arith.mulf %19, %10 : vector<16x1xf32>
    %21 = arith.subf %18, %16 : vector<16x1xf32>
    %cst_9 = arith.constant 7.93650805E-4 : f32
    %22 = vector.broadcast %cst_9 : f32 to vector<16x1xf32>
    %23 = arith.mulf %22, %21 : vector<16x1xf32>
    %24 = arith.addf %20, %23 : vector<16x1xf32>
    %cst_10 = arith.constant -0.808711171 : f32
    %25 = vector.broadcast %cst_10 : f32 to vector<16x1xf32>
    %26 = arith.subf %25, %24 : vector<16x1xf32>
    %cst_11 = arith.constant 0.000000e+00 : f32
    %27 = vector.broadcast %cst_11 : f32 to vector<16x1xf32>
    %28 = arith.select %4, %26, %27 : vector<16x1xi1>, vector<16x1xf32>
    %c0_12 = arith.constant 0 : index
    %c0_13 = arith.constant 0 : index
    %29 = vector.load %arg3[%c0_12, %c0_13] : memref<16x1xf32, #tpu.memory_space<vmem>>, vector<16x1xf32>
    tpu.vector_store %arg3[%c0_12, %c0_13], %28 {strides = array<i32>} : memref<16x1xf32, #tpu.memory_space<vmem>>, vector<16x1xf32>,
    %cst_14 = arith.constant dense<0xFF800000> : vector<16xf32>
    %30 = vector.multi_reduction <maximumf>, %0, %cst_14 [1] : vector<16x128xf32> to vector<16xf32>
    %31 = vector.shape_cast %30 : vector<16xf32> to vector<16x1xf32>
    %32 = vector.broadcast %31 : vector<16x1xf32> to vector<16x128xf32>
    %33 = arith.cmpf oge, %0, %32 : vector<16x128xf32>
    %c128_i32 = arith.constant 128 : i32
    %34 = vector.broadcast %c128_i32 : i32 to vector<16x128xi32>
    %35 = arith.select %33, %2, %34 : vector<16x128xi1>, vector<16x128xi32>
    %cst_15 = arith.constant dense<2147483647> : vector<16xi32>
    %36 = vector.multi_reduction <minsi>, %35, %cst_15 [1] : vector<16x128xi32> to vector<16xi32>
    %37 = vector.shape_cast %36 : vector<16xi32> to vector<16x1xi32>
    %38 = arith.cmpi eq, %37, %1 : vector<16x1xi32>
    %39 = arith.andi %38, %4 : vector<16x1xi1>
    %40 = arith.extui %39 : vector<16x1xi1> to vector<16x1xi32>
    %c0_16 = arith.constant 0 : index
    %c0_17 = arith.constant 0 : index
    %41 = vector.load %arg4[%c0_16, %c0_17] : memref<16x1xi32, #tpu.memory_space<vmem>>, vector<16x1xi32>
    tpu.vector_store %arg4[%c0_16, %c0_17], %40 {strides = array<i32>} : memref<16x1xi32, #tpu.memory_space<vmem>>, vector<16x1xi32>,
    %42 = arith.extui %4 : vector<16x1xi1> to vector<16x1xi32>
    %c0_18 = arith.constant 0 : index
    %c0_19 = arith.constant 0 : index
    %43 = vector.load %arg5[%c0_18, %c0_19] : memref<16x1xi32, #tpu.memory_space<vmem>>, vector<16x1xi32>
    tpu.vector_store %arg5[%c0_18, %c0_19], %42 {strides = array<i32>} : memref<16x1xi32, #tpu.memory_space<vmem>>, vector<16x1xi32>,
    return
  }
  func.func @transform_0(%arg0: i32) -> (i32, i32) {
    %c0_i32 = arith.constant 0 : i32
    %c0_i32_0 = arith.constant 0 : i32
    return %arg0, %c0_i32 : i32, i32
  }
  func.func @transform_1(%arg0: i32) -> (i32, i32) {
    %c0_i32 = arith.constant 0 : i32
    %c0_i32_0 = arith.constant 0 : i32
    return %arg0, %c0_i32 : i32, i32
  }
  func.func @transform_2(%arg0: i32) -> (i32, i32) {
    %c0_i32 = arith.constant 0 : i32
    %c0_i32_0 = arith.constant 0 : i32
    return %arg0, %c0_i32 : i32, i32
  }
  func.func @transform_3(%arg0: i32) -> (i32, i32) {
    %c0_i32 = arith.constant 0 : i32
    %c0_i32_0 = arith.constant 0 : i32
    return %arg0, %c0_i32 : i32, i32
  }
  func.func @transform_4(%arg0: i32) -> (i32, i32) {
    %c0_i32 = arith.constant 0 : i32
    %c0_i32_0 = arith.constant 0 : i32
    return %arg0, %c0_i32 : i32, i32
  }
}

</mosaic_0001>

<llo_original>
// kernel: tpu_custom_call.1
$region0: #{tpu_custom_call.1}
  #allocation0 [shape = 'u32[]', space=smem, size = 0x4, offset = 0x4, fixed_abs, tag = 'smem constant byte address 0x4 - core index']
  #allocation1 [shape = 'u32[144,128]{1,0:T(1,128)}', space=vmem, size = 0x12000, scoped, tag = 'internal scratch']
  %s0 = inlined_call_operand.vmem [shape: f32[16,128], index: 0, kind: input, shape index: {}]
  %s1 = inlined_call_operand.vmem [shape: s32[16,1], index: 1, kind: input, shape index: {}]
  %s2 = inlined_call_operand.vmem [shape: f32[16,1], index: 2, kind: output, shape index: {0}]
  %s3 = inlined_call_operand.vmem [shape: s32[16,1], index: 3, kind: output, shape index: {1}]
  %s4 = inlined_call_operand.vmem [shape: s32[16,1], index: 4, kind: output, shape index: {2}]
  %5 = xla_tuple %s2, %s3, %s4
  %s6 = sld [smem:[#allocation0]]
  $region34: #{tpu_custom_call.1} parent=0
    _
  %s8 = ssub.s32 1, %s6
  %s9 = scalar_select 0, %s8, %s6
  // Predicated region
  $region2: #{tpu_custom_call.1} parent=0 // pred_check
    _
  $region3: #{tpu_custom_call.1} parent=0 // pred_check_branch
    %11 = sbr.rel (0) target = $region5
  $region4: #{tpu_custom_call.1} parent=0 // pred_region
    _
  $region5: #{tpu_custom_call.1} parent=0 // pred_fallthru
    _
  // Predicated region
  $region6: #{tpu_custom_call.1} parent=0 // pred_check
    _
  $region7: #{tpu_custom_call.1} parent=0 // pred_check_branch
    %13 = sbr.rel (0) target = $region9
  $region8: #{tpu_custom_call.1} parent=0 // pred_region
    _
  $region9: #{tpu_custom_call.1} parent=0 // pred_fallthru
    _
  %v14 = vld [vmem:[%s0] sm:$0xff]
  %v15 = vld [vmem:[%s0 + $0x8] sm:$0xff]
  %v16 = vld [vmem:[%s1] sm:$0xff]
  %v17 = vld [vmem:[%s1 + $0x8] sm:$0xff]
  %v18 = vlaneseq
  %v19 = vand.u32 %v18, 127
  %vm20 = vcmp.ne.s32.totalorder %v16, 0
  %vm21 = vcmp.ne.s32.totalorder %v17, 0
  %22 = vset.pattern.permute.xlu0 0
  %23 = vperm.xlu0 %22, %v16
  %v24 = vpop.permute.xlu0 %23
  %25 = vset.pattern.permute.xlu0 0
  %26 = vperm.xlu0 %25, %v17
  %v27 = vpop.permute.xlu0 %26
  %vm28 = vcmp.eq.s32.totalorder %v19, %v24
  %vm29 = vcmp.eq.s32.totalorder %v19, %v27
  %v30 = vsel %vm28, %v14, 0.0
  %v31 = vsel %vm29, %v15, 0.0
  %32 = vadd.xlane.f32.xlu0 %v30
  %v33 = vpop.xlane.xlu0 %32
  %34 = vadd.xlane.f32.xlu0 %v31
  %v35 = vpop.xlane.xlu0 %34
  %vm36 = vcmp.eq.s32.totalorder %v19, 0
  %v37 = vsel %vm36, %v14, 0.0
  %v38 = vsel %vm36, %v15, 0.0
  %39 = vadd.xlane.f32.xlu0 %v37
  %v40 = vpop.xlane.xlu0 %39
  %41 = vadd.xlane.f32.xlu0 %v38
  %v42 = vpop.xlane.xlu0 %41
  %43 = vadd.xlane.f32.xlu0 %v14
  %v44 = vpop.xlane.xlu0 %43
  %45 = vadd.xlane.f32.xlu0 %v15
  %v46 = vpop.xlane.xlu0 %45
  %v47 = vmul.f32 %v33, 0.89920634
  %v48 = vmul.f32 %v35, 0.89920634
  %v49 = vsub.f32 %v44, %v40
  %v50 = vsub.f32 %v46, %v42
  %v51 = vmul.f32 %v49, 0.0007936508
  %v52 = vmul.f32 %v50, 0.0007936508
  %v53 = vadd.f32 %v47, %v51
  %v54 = vadd.f32 %v48, %v52
  %v55 = vsub.f32 -0.8087112, %v53
  %v56 = vsub.f32 -0.8087112, %v54
  %v57 = vsel %vm20, %v55, 0.0
  %v58 = vsel %vm21, %v56, 0.0
  %vm59 = vcmask 7168
  %60 = vst.msk [vmem:[%s2] sm:$0xff] %vm59, %v57
  %61 = vst.msk [vmem:[%s2 + $0x8] sm:$0xff] %vm59, %v58
  %62 = vmax.xlane.f32.xlu0 %v14
  %v63 = vpop.xlane.xlu0 %62
  %64 = vmax.xlane.f32.xlu0 %v15
  %v65 = vpop.xlane.xlu0 %64
  %vm66 = vcmp.ge.f32.partialorder %v14, %v63
  %vm67 = vcmp.ge.f32.partialorder %v15, %v65
  %v68 = vsel %vm66, %v19, 128
  %v69 = vsel %vm67, %v19, 128
  %v70 = vand.u32 %v68, 65535
  %v71 = vshra.s32 %v68, 16
  %v72 = vcvt.s32.f32 %v70
  %v73 = vcvt.s32.f32 %v71
  %74 = vmin.xlane.f32.xlu0 %v73
  %v75 = vpop.xlane.xlu0 %74
  %vm76 = vcmp.eq.f32.partialorder %v73, %v75
  %v77 = vsel %vm76, %v72, inf
  %78 = vmin.xlane.f32.xlu0 %v77
  %v79 = vpop.xlane.xlu0 %78
  %v80 = vcvt.f32.s32 %v79
  %v81 = vcvt.f32.s32 %v75
  %v82 = vshll.u32 %v81, 16
  %v83 = vadd.s32 %v82, %v80
  %v84 = vand.u32 %v69, 65535
  %v85 = vshra.s32 %v69, 16
  %v86 = vcvt.s32.f32 %v84
  %v87 = vcvt.s32.f32 %v85
  %88 = vmin.xlane.f32.xlu0 %v87
  %v89 = vpop.xlane.xlu0 %88
  %vm90 = vcmp.eq.f32.partialorder %v87, %v89
  %v91 = vsel %vm90, %v86, inf
  %92 = vmin.xlane.f32.xlu0 %v91
  %v93 = vpop.xlane.xlu0 %92
  %v94 = vcvt.f32.s32 %v93
  %v95 = vcvt.f32.s32 %v89
  %v96 = vshll.u32 %v95, 16
  %v97 = vadd.s32 %v96, %v94
  %vm98 = vcmp.eq.s32.totalorder %v83, %v16
  %vm99 = vcmp.eq.s32.totalorder %v97, %v17
  %vm100 = vmand %vm98, %vm20
  %vm101 = vmand %vm99, %vm21
  %v102 = vsel %vm100, 1, 0
  %v103 = vsel %vm101, 1, 0
  %104 = vst.msk [vmem:[%s3] sm:$0xff] %vm59, %v102
  %105 = vst.msk [vmem:[%s3 + $0x8] sm:$0xff] %vm59, %v103
  %v106 = vsel %vm20, 1, 0
  %v107 = vsel %vm21, 1, 0
  %108 = vst.msk [vmem:[%s4] sm:$0xff] %vm59, %v106
  %109 = vst.msk [vmem:[%s4 + $0x8] sm:$0xff] %vm59, %v107
  // Predicated region
  $region10: #{tpu_custom_call.1} parent=0 // pred_check
    _
  $region11: #{tpu_custom_call.1} parent=0 // pred_check_branch
    %111 = sbr.rel (0) target = $region13
  $region12: #{tpu_custom_call.1} parent=0 // pred_region
    _
  $region13: #{tpu_custom_call.1} parent=0 // pred_fallthru
    _
  // Predicated region
  $region14: #{tpu_custom_call.1} parent=0 // pred_check
    _
  $region15: #{tpu_custom_call.1} parent=0 // pred_check_branch
    %113 = sbr.rel (0) target = $region17
  $region16: #{tpu_custom_call.1} parent=0 // pred_region
    _
  $region17: #{tpu_custom_call.1} parent=0 // pred_fallthru
    _
  // Predicated region
  $region18: #{tpu_custom_call.1} parent=0 // pred_check
    _
  $region19: #{tpu_custom_call.1} parent=0 // pred_check_branch
    %115 = sbr.rel (0) target = $region21
  $region20: #{tpu_custom_call.1} parent=0 // pred_region
    _
  $region21: #{tpu_custom_call.1} parent=0 // pred_fallthru
    _
  // Predicated region
  $region22: #{tpu_custom_call.1} parent=0 // pred_check
    _
  $region23: #{tpu_custom_call.1} parent=0 // pred_check_branch
    %117 = sbr.rel (0) target = $region25
  $region24: #{tpu_custom_call.1} parent=0 // pred_region
    _
  $region25: #{tpu_custom_call.1} parent=0 // pred_fallthru
    _
  // Predicated region
  $region26: #{tpu_custom_call.1} parent=0 // pred_check
    _
  $region27: #{tpu_custom_call.1} parent=0 // pred_check_branch
    %119 = sbr.rel (0) target = $region29
  $region28: #{tpu_custom_call.1} parent=0 // pred_region
    _
  $region29: #{tpu_custom_call.1} parent=0 // pred_fallthru
    _
  // Predicated region
  $region30: #{tpu_custom_call.1} parent=0 // pred_check
    _
  $region31: #{tpu_custom_call.1} parent=0 // pred_check_branch
    %121 = sbr.rel (0) target = $region33
  $region32: #{tpu_custom_call.1} parent=0 // pred_region
    _
  $region33: #{tpu_custom_call.1} parent=0 // pred_fallthru
    _

</llo_original>
